<compile_context>
chip_gen: v7x
topology: tpu7x:2x2x1
jax: 0.10.0
libtpu: 0.0.40
codegen_flags: <defaults>
</compile_context>

<pallas_src>
import functools

import jax
import jax.numpy as jnp
import numpy as np
from jax.experimental import pallas as pl
from jax.experimental.pallas import tpu as pltpu

# ----------------------------- configuration -------------------------------
HIDDEN_SIZE = 64
NUM_HEADS = 2
EXPAND_K = 0.5
EXPAND_V = 1.0
KEY_DIM = int(HIDDEN_SIZE * EXPAND_K)          # 32
VALUE_DIM = int(HIDDEN_SIZE * EXPAND_V)        # 64
HEAD_K_DIM = KEY_DIM // NUM_HEADS              # 16
HEAD_V_DIM = VALUE_DIM // NUM_HEADS            # 32
GATE_LOW_RANK_DIM = 16
GATE_LOGIT_NORMALIZER = 16.0
NORM_EPS = 1e-5

BATCH = 2
SEQ = 8
CHUNK = 8   # chunkwise-recurrence chunk length (<= 64 keeps exp(-cumdecay) bounded)


# --------------------- fully fused GLA forward kernel -----------------------
def _gla_fused_kernel(x_ref, wfused_ref, wgk2_ref, bgk2_ref, normw_ref, wo_ref,
                      o_ref, *, num_heads, head_k_dim, head_v_dim, chunk,
                      gate_logit_normalizer, eps):
    # x_ref:      (1, T, D)        one batch element per grid step
    # wfused_ref: (D, 2*Kd + 2*Vd + R)   [Wq | Wk | Wv | Wg | Wgk1]
    # wgk2_ref:   (R, Kd)   bgk2_ref: (1, Kd)
    # normw_ref:  (1, head_v_dim)   wo_ref: (Vd, D)   o_ref: (1, T, D)
    T = x_ref.shape[1]
    hidden = wo_ref.shape[1]
    key_dim = num_heads * head_k_dim
    value_dim = num_heads * head_v_dim
    n_chunks = T // chunk
    scale = head_k_dim ** -0.5

    x = x_ref[0].astype(jnp.float32)                                    # (T, D)

    # --- one fused projection matmul for q | k | v | g | gk_lowrank ---
    proj = jnp.dot(x, wfused_ref[...], preferred_element_type=jnp.float32)
    q_all = proj[:, 0:key_dim] * scale          # hoist 1/sqrt(Dk) onto q once
    k_all = proj[:, key_dim:2 * key_dim]
    v_all = proj[:, 2 * key_dim:2 * key_dim + value_dim]
    g_all = proj[:, 2 * key_dim + value_dim:2 * key_dim + 2 * value_dim]
    gk_lr = proj[:, 2 * key_dim + 2 * value_dim:]
    gk_logits = (jnp.dot(gk_lr, wgk2_ref[...],
                         preferred_element_type=jnp.float32)
                 + bgk2_ref[...])                                        # (T, Kd)

    # stable logsigmoid, normalized -> per-step log decay (<= 0), head-packed
    logsig = jnp.minimum(gk_logits, 0.0) - jnp.log1p(jnp.exp(-jnp.abs(gk_logits)))
    glog = logsig / gate_logit_normalizer                                # (T, Kd)

    # causal (incl. diagonal) mask; its float form doubles as the lower-triangular
    # ones matrix used to compute the in-chunk cumulative decay on the MXU.
    row = jax.lax.broadcasted_iota(jnp.int32, (chunk, chunk), 0)
    col = jax.lax.broadcasted_iota(jnp.int32, (chunk, chunk), 1)
    causal = row >= col
    tri = causal.astype(jnp.float32)                                     # (C, C)

    norm_w = normw_ref[...]                                              # (1, Dv)

    # per-head (Dk, Dv) recurrent state, carried only across chunks
    states = [jnp.zeros((head_k_dim, head_v_dim), jnp.float32)
              for _ in range(num_heads)]

    for c in range(n_chunks):
        r0 = c * chunk
        gc = glog[r0:r0 + chunk, :]                                      # (C, Kd)
        # inclusive cumulative log decay within the chunk (MXU, no serial scan)
        a_c = jnp.dot(tri, gc, preferred_element_type=jnp.float32)       # (C, Kd)
        a_last = a_c[chunk - 1:chunk, :]                                 # (1, Kd)
        # TODO(synk): for very long chunks / extreme gate logits, exp(-a_c) needs
        # secondary sub-chunking (as in fla chunk_gla); safe for C <= 64 here.
        q_dec = q_all[r0:r0 + chunk, :] * jnp.exp(a_c)                   # (C, Kd)
        k_dec = k_all[r0:r0 + chunk, :] * jnp.exp(-a_c)                  # (C, Kd)
        k_rem = k_all[r0:r0 + chunk, :] * jnp.exp(a_last - a_c)          # (C, Kd)
        state_decay = jnp.exp(a_last)                                    # (1, Kd)

        out_c = jnp.zeros((chunk, hidden), jnp.float32)
        for h in range(num_heads):
            ks = slice(h * head_k_dim, (h + 1) * head_k_dim)
            vs = slice(h * head_v_dim, (h + 1) * head_v_dim)
            qh = q_dec[:, ks]                                            # (C, Dk)
            kh = k_dec[:, ks]                                            # (C, Dk)
            vh = v_all[r0:r0 + chunk, vs]                                # (C, Dv)

            # intra-chunk: causal (C, C) scores @ (C, Dv)
            sc = jax.lax.dot_general(qh, kh, (((1,), (1,)), ((), ())),
                                     preferred_element_type=jnp.float32)
            sc = jnp.where(causal, sc, 0.0)
            o_h = jnp.dot(sc, vh, preferred_element_type=jnp.float32)    # (C, Dv)

            # inter-chunk contribution from the carried state
            if c > 0:
                o_h = o_h + jnp.dot(qh, states[h],
                                    preferred_element_type=jnp.float32)

            # carry state: S <- diag(exp(A_last)) S + (k * exp(A_last - A))^T V
            if c + 1 < n_chunks:
                states[h] = (states[h] * state_decay[:, ks].T
                             + jax.lax.dot_general(
                                 k_rem[:, ks], vh, (((0,), (0,)), ((), ())),
                                 preferred_element_type=jnp.float32))

            # fused RMSNorm (per head) + swish output gate (FusedRMSNormGated)
            var = jnp.mean(o_h * o_h, axis=-1, keepdims=True)
            o_h = o_h * jax.lax.rsqrt(var + eps) * norm_w
            gh = g_all[r0:r0 + chunk, vs]
            o_h = o_h * (gh * jax.nn.sigmoid(gh))

            # output projection decomposed per head: o_h @ Wo[h*Dv:(h+1)*Dv, :]
            out_c = out_c + jnp.dot(o_h, wo_ref[vs, :],
                                    preferred_element_type=jnp.float32)

        # one full-width store per chunk (no per-row masked stores)
        o_ref[0, r0:r0 + chunk, :] = out_c.astype(o_ref.dtype)


def gla_forward(x, p):
    """x: (B, T, HIDDEN_SIZE) -> (B, T, HIDDEN_SIZE), fully fused in one kernel."""
    B, T, D = x.shape
    chunk = min(CHUNK, T)
    assert T % chunk == 0, "T must be a multiple of the chunk size"

    # fuse all input projections into a single weight matrix: [Wq|Wk|Wv|Wg|Wgk1]
    w_fused = jnp.concatenate(
        [p["wq"], p["wk"], p["wv"], p["wg"], p["wgk1"]], axis=1)         # (D, 208)

    kernel = functools.partial(
        _gla_fused_kernel,
        num_heads=NUM_HEADS, head_k_dim=HEAD_K_DIM, head_v_dim=HEAD_V_DIM,
        chunk=chunk, gate_logit_normalizer=GATE_LOGIT_NORMALIZER, eps=NORM_EPS)

    def full_spec(shape):
        return pl.BlockSpec(shape, lambda b, _n=len(shape): (0,) * _n)

    return pl.pallas_call(
        kernel,
        out_shape=jax.ShapeDtypeStruct((B, T, D), x.dtype),
        grid=(B,),
        in_specs=[
            pl.BlockSpec((1, T, D), lambda b: (b, 0, 0)),   # x, one batch per step
            full_spec(w_fused.shape),                       # fused projection weight
            full_spec(p["wgk2"].shape),
            full_spec(p["bgk2"].shape),
            full_spec(p["norm_w"].shape),
            full_spec(p["wo"].shape),
        ],
        out_specs=pl.BlockSpec((1, T, D), lambda b: (b, 0, 0)),
        compiler_params=pltpu.CompilerParams(
            dimension_semantics=("parallel",)),             # batch axis feeds both v7x TCs
    )(x, w_fused, p["wgk2"], p["bgk2"], p["norm_w"], p["wo"])


# ------------------------- pure-JAX reference (check) -----------------------
def gla_reference(x, p):
    B, T, D = x.shape
    q = x @ p["wq"]
    k = x @ p["wk"]
    v = x @ p["wv"]
    g = x @ p["wg"]
    gk = (x @ p["wgk1"]) @ p["wgk2"] + p["bgk2"]

    q = q.reshape(B, T, NUM_HEADS, HEAD_K_DIM)
    k = k.reshape(B, T, NUM_HEADS, HEAD_K_DIM)
    gk = gk.reshape(B, T, NUM_HEADS, HEAD_K_DIM)
    v = v.reshape(B, T, NUM_HEADS, HEAD_V_DIM)
    g = g.reshape(B, T, NUM_HEADS, HEAD_V_DIM)

    gk = jax.nn.log_sigmoid(gk) / GATE_LOGIT_NORMALIZER
    scale = HEAD_K_DIM ** -0.5

    def scan_fn(h, inp):
        q_t, k_t, v_t, gk_t = inp  # (B, H, Dk)/(B, H, Dv)
        h = h * jnp.exp(gk_t)[..., None] + k_t[..., None] * v_t[..., None, :]
        o_t = jnp.einsum("bhk,bhkv->bhv", q_t * scale, h)
        return h, o_t

    h0 = jnp.zeros((B, NUM_HEADS, HEAD_K_DIM, HEAD_V_DIM), jnp.float32)
    seq_inputs = tuple(t.transpose(1, 0, 2, 3) for t in (q, k, v, gk))
    _, o = jax.lax.scan(scan_fn, h0, seq_inputs)
    o = o.transpose(1, 0, 2, 3)                              # (B, T, H, Dv)

    var = jnp.mean(o * o, axis=-1, keepdims=True)
    o = o * jax.lax.rsqrt(var + NORM_EPS) * p["norm_w"][0]
    o = o * (g * jax.nn.sigmoid(g))
    o = o.reshape(B, T, VALUE_DIM) @ p["wo"]
    return o


# --------------------------------- main -------------------------------------
def make_params(key):
    ks = jax.random.split(key, 8)
    s = 0.05
    return {
        "wq": jax.random.normal(ks[0], (HIDDEN_SIZE, KEY_DIM), jnp.float32) * s,
        "wk": jax.random.normal(ks[1], (HIDDEN_SIZE, KEY_DIM), jnp.float32) * s,
        "wv": jax.random.normal(ks[2], (HIDDEN_SIZE, VALUE_DIM), jnp.float32) * s,
        "wg": jax.random.normal(ks[3], (HIDDEN_SIZE, VALUE_DIM), jnp.float32) * s,
        "wgk1": jax.random.normal(ks[4], (HIDDEN_SIZE, GATE_LOW_RANK_DIM), jnp.float32) * s,
        "wgk2": jax.random.normal(ks[5], (GATE_LOW_RANK_DIM, KEY_DIM), jnp.float32) * s,
        "bgk2": jax.random.normal(ks[6], (1, KEY_DIM), jnp.float32) * s,
        "norm_w": jnp.ones((1, HEAD_V_DIM), jnp.float32),     # RMSNorm weight init
        "wo": jax.random.normal(ks[7], (VALUE_DIM, HIDDEN_SIZE), jnp.float32) * s,
    }


if __name__ == "__main__":
    key = jax.random.PRNGKey(0)
    key_x, key_p = jax.random.split(key)
    x = jax.random.normal(key_x, (BATCH, SEQ, HIDDEN_SIZE), jnp.float32)
    params = make_params(key_p)

    out = jax.jit(gla_forward)(x, params)
    out = jax.block_until_ready(out)

    ref = jax.block_until_ready(gla_reference(x, params))
    np.testing.assert_allclose(np.asarray(out), np.asarray(ref), rtol=2e-2, atol=2e-2)
    assert out.shape == (BATCH, SEQ, HIDDEN_SIZE)
    assert bool(jnp.all(jnp.isfinite(out)))

    print("KERNEL_OK")
</pallas_src>

<mosaic_0001>
module attributes {stable_mosaic.version = 11 : i64} {
  func.func @_gla_fused_kernel(%arg0: i32, %arg1: memref<1x8x64xf32, #tpu.memory_space<vmem>>, %arg2: memref<64x208xf32, #tpu.memory_space<vmem>>, %arg3: memref<16x32xf32, #tpu.memory_space<vmem>>, %arg4: memref<1x32xf32, #tpu.memory_space<vmem>>, %arg5: memref<1x32xf32, #tpu.memory_space<vmem>>, %arg6: memref<64x64xf32, #tpu.memory_space<vmem>>, %arg7: memref<1x8x64xf32, #tpu.memory_space<vmem>>) attributes {dimension_semantics = [#tpu.dimension_semantics<parallel>], iteration_bounds = array<i64: 2>, scalar_prefetch = 0 : i64, scratch_operands = 0 : i64, tpu.core_type = #tpu.core_type<tc>, window_params = [{transform_indices = @transform_0, window_bounds = array<i64: 1, 8, 64>}, {pipeline_mode = #tpu.pipeline_mode<synchronous>, transform_indices = @transform_1, window_bounds = array<i64: 64, 208>}, {pipeline_mode = #tpu.pipeline_mode<synchronous>, transform_indices = @transform_2, window_bounds = array<i64: 16, 32>}, {pipeline_mode = #tpu.pipeline_mode<synchronous>, transform_indices = @transform_3, window_bounds = array<i64: 1, 32>}, {pipeline_mode = #tpu.pipeline_mode<synchronous>, transform_indices = @transform_4, window_bounds = array<i64: 1, 32>}, {pipeline_mode = #tpu.pipeline_mode<synchronous>, transform_indices = @transform_5, window_bounds = array<i64: 64, 64>}, {transform_indices = @transform_6, window_bounds = array<i64: 1, 8, 64>}]} {
    %c0 = arith.constant 0 : index
    %c0_0 = arith.constant 0 : index
    %c0_1 = arith.constant 0 : index
    %0 = vector.load %arg1[%c0, %c0_0, %c0_1] : memref<1x8x64xf32, #tpu.memory_space<vmem>>, vector<1x8x64xf32>
    %1 = vector.shape_cast %0 : vector<1x8x64xf32> to vector<8x64xf32>
    %c0_2 = arith.constant 0 : index
    %c0_3 = arith.constant 0 : index
    %2 = vector.load %arg2[%c0_2, %c0_3] : memref<64x208xf32, #tpu.memory_space<vmem>>, vector<64x208xf32>
    %cst = arith.constant dense<0.000000e+00> : vector<8x208xf32>
    %3 = tpu.matmul %1, %2, %cst {dimension_numbers = #tpu.dot_dimension_numbers<[1], [0], [0], [1], [0, 0, 1, 1], [], []>} : vector<8x64xf32>, vector<64x208xf32>, vector<8x208xf32> -> vector<8x208xf32>
    %4 = vector.extract_strided_slice %3 {offsets = [0, 0], sizes = [8, 32], strides = [1, 1]} : vector<8x208xf32> to vector<8x32xf32>
    %cst_4 = arith.constant 2.500000e-01 : f32
    %5 = vector.broadcast %cst_4 : f32 to vector<8x32xf32>
    %6 = arith.mulf %4, %5 : vector<8x32xf32>
    %7 = vector.extract_strided_slice %3 {offsets = [0, 32], sizes = [8, 32], strides = [1, 1]} : vector<8x208xf32> to vector<8x32xf32>
    %8 = vector.extract_strided_slice %3 {offsets = [0, 64], sizes = [8, 64], strides = [1, 1]} : vector<8x208xf32> to vector<8x64xf32>
    %9 = vector.extract_strided_slice %3 {offsets = [0, 128], sizes = [8, 64], strides = [1, 1]} : vector<8x208xf32> to vector<8x64xf32>
    %10 = vector.extract_strided_slice %3 {offsets = [0, 192], sizes = [8, 16], strides = [1, 1]} : vector<8x208xf32> to vector<8x16xf32>
    %c0_5 = arith.constant 0 : index
    %c0_6 = arith.constant 0 : index
    %11 = vector.load %arg3[%c0_5, %c0_6] : memref<16x32xf32, #tpu.memory_space<vmem>>, vector<16x32xf32>
    %cst_7 = arith.constant dense<0.000000e+00> : vector<8x32xf32>
    %12 = tpu.matmul %10, %11, %cst_7 {dimension_numbers = #tpu.dot_dimension_numbers<[1], [0], [0], [1], [0, 0, 1, 1], [], []>} : vector<8x16xf32>, vector<16x32xf32>, vector<8x32xf32> -> vector<8x32xf32>
    %c0_8 = arith.constant 0 : index
    %c0_9 = arith.constant 0 : index
    %13 = vector.load %arg4[%c0_8, %c0_9] : memref<1x32xf32, #tpu.memory_space<vmem>>, vector<1x32xf32>
    %14 = vector.broadcast %13 : vector<1x32xf32> to vector<8x32xf32>
    %15 = arith.addf %12, %14 : vector<8x32xf32>
    %cst_10 = arith.constant 0.000000e+00 : f32
    %16 = vector.broadcast %cst_10 : f32 to vector<8x32xf32>
    %17 = arith.minimumf %15, %16 : vector<8x32xf32>
    %18 = math.absf %15 : vector<8x32xf32>
    %cst_11 = arith.constant 0.000000e+00 : f32
    %19 = vector.broadcast %cst_11 : f32 to vector<8x32xf32>
    %20 = arith.subf %19, %18 : vector<8x32xf32>
    %21 = math.exp %20 : vector<8x32xf32>
    %22 = math.log1p %21 : vector<8x32xf32>
    %23 = arith.subf %17, %22 : vector<8x32xf32>
    %cst_12 = arith.constant 1.600000e+01 : f32
    %24 = vector.broadcast %cst_12 : f32 to vector<8x32xf32>
    %25 = arith.divf %23, %24 : vector<8x32xf32>
    %26 = tpu.iota {dimensions = array<i32: 0>} : vector<8x8xi32>
    %27 = tpu.iota {dimensions = array<i32: 1>} : vector<8x8xi32>
    %28 = arith.cmpi sge, %26, %27 : vector<8x8xi32>
    %29 = arith.extui %28 : vector<8x8xi1> to vector<8x8xi32>
    %30 = arith.sitofp %29 : vector<8x8xi32> to vector<8x8xf32>
    %c0_13 = arith.constant 0 : index
    %c0_14 = arith.constant 0 : index
    %31 = vector.load %arg5[%c0_13, %c0_14] : memref<1x32xf32, #tpu.memory_space<vmem>>, vector<1x32xf32>
    %cst_15 = arith.constant dense<0.000000e+00> : vector<8x32xf32>
    %32 = tpu.matmul %30, %25, %cst_15 {dimension_numbers = #tpu.dot_dimension_numbers<[1], [0], [0], [1], [0, 0, 1, 1], [], []>} : vector<8x8xf32>, vector<8x32xf32>, vector<8x32xf32> -> vector<8x32xf32>
    %33 = math.exp %32 : vector<8x32xf32>
    %34 = arith.mulf %6, %33 : vector<8x32xf32>
    %cst_16 = arith.constant 0.000000e+00 : f32
    %35 = vector.broadcast %cst_16 : f32 to vector<8x32xf32>
    %36 = arith.subf %35, %32 : vector<8x32xf32>
    %37 = math.exp %36 : vector<8x32xf32>
    %38 = arith.mulf %7, %37 : vector<8x32xf32>
    %cst_17 = arith.constant 0.000000e+00 : f32
    %39 = vector.broadcast %cst_17 : f32 to vector<8x64xf32>
    %40 = vector.extract_strided_slice %34 {offsets = [0, 0], sizes = [8, 16], strides = [1, 1]} : vector<8x32xf32> to vector<8x16xf32>
    %41 = vector.extract_strided_slice %38 {offsets = [0, 0], sizes = [8, 16], strides = [1, 1]} : vector<8x32xf32> to vector<8x16xf32>
    %42 = vector.extract_strided_slice %8 {offsets = [0, 0], sizes = [8, 32], strides = [1, 1]} : vector<8x64xf32> to vector<8x32xf32>
    %cst_18 = arith.constant dense<0.000000e+00> : vector<8x8xf32>
    %43 = tpu.matmul %40, %41, %cst_18 {dimension_numbers = #tpu.dot_dimension_numbers<[1], [1], [0], [0], [0, 0, 1, 0], [], []>} : vector<8x16xf32>, vector<8x16xf32>, vector<8x8xf32> -> vector<8x8xf32>
    %cst_19 = arith.constant 0.000000e+00 : f32
    %44 = vector.broadcast %cst_19 : f32 to vector<8x8xf32>
    %45 = arith.select %28, %43, %44 : vector<8x8xi1>, vector<8x8xf32>
    %cst_20 = arith.constant dense<0.000000e+00> : vector<8x32xf32>
    %46 = tpu.matmul %45, %42, %cst_20 {dimension_numbers = #tpu.dot_dimension_numbers<[1], [0], [0], [1], [0, 0, 1, 1], [], []>} : vector<8x8xf32>, vector<8x32xf32>, vector<8x32xf32> -> vector<8x32xf32>
    %47 = arith.mulf %46, %46 : vector<8x32xf32>
    %cst_21 = arith.constant dense<0.000000e+00> : vector<8xf32>
    %48 = vector.multi_reduction <add>, %47, %cst_21 [1] : vector<8x32xf32> to vector<8xf32>
    %49 = vector.shape_cast %48 : vector<8xf32> to vector<8x1xf32>
    %cst_22 = arith.constant 3.200000e+01 : f32
    %50 = vector.broadcast %cst_22 : f32 to vector<8x1xf32>
    %51 = arith.divf %49, %50 : vector<8x1xf32>
    %cst_23 = arith.constant 9.99999974E-6 : f32
    %52 = vector.broadcast %cst_23 : f32 to vector<8x1xf32>
    %53 = arith.addf %51, %52 : vector<8x1xf32>
    %54 = math.rsqrt %53 : vector<8x1xf32>
    %55 = vector.broadcast %54 : vector<8x1xf32> to vector<8x32xf32>
    %56 = arith.mulf %46, %55 : vector<8x32xf32>
    %57 = vector.broadcast %31 : vector<1x32xf32> to vector<8x32xf32>
    %58 = arith.mulf %56, %57 : vector<8x32xf32>
    %59 = vector.extract_strided_slice %9 {offsets = [0, 0], sizes = [8, 32], strides = [1, 1]} : vector<8x64xf32> to vector<8x32xf32>
    %60 = arith.negf %59 : vector<8x32xf32>
    %61 = math.exp %60 : vector<8x32xf32>
    %cst_24 = arith.constant 1.000000e+00 : f32
    %62 = vector.broadcast %cst_24 : f32 to vector<8x32xf32>
    %63 = arith.addf %62, %61 : vector<8x32xf32>
    %64 = arith.divf %62, %63 : vector<8x32xf32>
    %65 = arith.mulf %59, %64 : vector<8x32xf32>
    %66 = arith.mulf %58, %65 : vector<8x32xf32>
    %c0_25 = arith.constant 0 : index
    %c0_26 = arith.constant 0 : index
    %67 = vector.load %arg6[%c0_25, %c0_26] : memref<64x64xf32, #tpu.memory_space<vmem>>, vector<32x64xf32>
    %cst_27 = arith.constant dense<0.000000e+00> : vector<8x64xf32>
    %68 = tpu.matmul %66, %67, %cst_27 {dimension_numbers = #tpu.dot_dimension_numbers<[1], [0], [0], [1], [0, 0, 1, 1], [], []>} : vector<8x32xf32>, vector<32x64xf32>, vector<8x64xf32> -> vector<8x64xf32>
    %69 = arith.addf %39, %68 : vector<8x64xf32>
    %70 = vector.extract_strided_slice %34 {offsets = [0, 16], sizes = [8, 16], strides = [1, 1]} : vector<8x32xf32> to vector<8x16xf32>
    %71 = vector.extract_strided_slice %38 {offsets = [0, 16], sizes = [8, 16], strides = [1, 1]} : vector<8x32xf32> to vector<8x16xf32>
    %72 = vector.extract_strided_slice %8 {offsets = [0, 32], sizes = [8, 32], strides = [1, 1]} : vector<8x64xf32> to vector<8x32xf32>
    %cst_28 = arith.constant dense<0.000000e+00> : vector<8x8xf32>
    %73 = tpu.matmul %70, %71, %cst_28 {dimension_numbers = #tpu.dot_dimension_numbers<[1], [1], [0], [0], [0, 0, 1, 0], [], []>} : vector<8x16xf32>, vector<8x16xf32>, vector<8x8xf32> -> vector<8x8xf32>
    %cst_29 = arith.constant 0.000000e+00 : f32
    %74 = vector.broadcast %cst_29 : f32 to vector<8x8xf32>
    %75 = arith.select %28, %73, %74 : vector<8x8xi1>, vector<8x8xf32>
    %cst_30 = arith.constant dense<0.000000e+00> : vector<8x32xf32>
    %76 = tpu.matmul %75, %72, %cst_30 {dimension_numbers = #tpu.dot_dimension_numbers<[1], [0], [0], [1], [0, 0, 1, 1], [], []>} : vector<8x8xf32>, vector<8x32xf32>, vector<8x32xf32> -> vector<8x32xf32>
    %77 = arith.mulf %76, %76 : vector<8x32xf32>
    %cst_31 = arith.constant dense<0.000000e+00> : vector<8xf32>
    %78 = vector.multi_reduction <add>, %77, %cst_31 [1] : vector<8x32xf32> to vector<8xf32>
    %79 = vector.shape_cast %78 : vector<8xf32> to vector<8x1xf32>
    %cst_32 = arith.constant 3.200000e+01 : f32
    %80 = vector.broadcast %cst_32 : f32 to vector<8x1xf32>
    %81 = arith.divf %79, %80 : vector<8x1xf32>
    %cst_33 = arith.constant 9.99999974E-6 : f32
    %82 = vector.broadcast %cst_33 : f32 to vector<8x1xf32>
    %83 = arith.addf %81, %82 : vector<8x1xf32>
    %84 = math.rsqrt %83 : vector<8x1xf32>
    %85 = vector.broadcast %84 : vector<8x1xf32> to vector<8x32xf32>
    %86 = arith.mulf %76, %85 : vector<8x32xf32>
    %87 = vector.broadcast %31 : vector<1x32xf32> to vector<8x32xf32>
    %88 = arith.mulf %86, %87 : vector<8x32xf32>
    %89 = vector.extract_strided_slice %9 {offsets = [0, 32], sizes = [8, 32], strides = [1, 1]} : vector<8x64xf32> to vector<8x32xf32>
    %90 = arith.negf %89 : vector<8x32xf32>
    %91 = math.exp %90 : vector<8x32xf32>
    %cst_34 = arith.constant 1.000000e+00 : f32
    %92 = vector.broadcast %cst_34 : f32 to vector<8x32xf32>
    %93 = arith.addf %92, %91 : vector<8x32xf32>
    %94 = arith.divf %92, %93 : vector<8x32xf32>
    %95 = arith.mulf %89, %94 : vector<8x32xf32>
    %96 = arith.mulf %88, %95 : vector<8x32xf32>
    %c32 = arith.constant 32 : index
    %c0_35 = arith.constant 0 : index
    %97 = vector.load %arg6[%c32, %c0_35] : memref<64x64xf32, #tpu.memory_space<vmem>>, vector<32x64xf32>
    %cst_36 = arith.constant dense<0.000000e+00> : vector<8x64xf32>
    %98 = tpu.matmul %96, %97, %cst_36 {dimension_numbers = #tpu.dot_dimension_numbers<[1], [0], [0], [1], [0, 0, 1, 1], [], []>} : vector<8x32xf32>, vector<32x64xf32>, vector<8x64xf32> -> vector<8x64xf32>
    %99 = arith.addf %69, %98 : vector<8x64xf32>
    %c0_37 = arith.constant 0 : index
    %c0_38 = arith.constant 0 : index
    %c0_39 = arith.constant 0 : index
    %100 = vector.load %arg7[%c0_37, %c0_38, %c0_39] : memref<1x8x64xf32, #tpu.memory_space<vmem>>, vector<1x8x64xf32>
    %101 = vector.shape_cast %100 : vector<1x8x64xf32> to vector<8x64xf32>
    %102 = vector.shape_cast %99 : vector<8x64xf32> to vector<1x8x64xf32>
    tpu.vector_store %arg7[%c0_37, %c0_38, %c0_39], %102 {strides = array<i32>} : memref<1x8x64xf32, #tpu.memory_space<vmem>>, vector<1x8x64xf32>,
    return
  }
  func.func @transform_0(%arg0: i32) -> (i32, i32, i32) {
    %c0_i32 = arith.constant 0 : i32
    %c0_i32_0 = arith.constant 0 : i32
    %c0_i32_1 = arith.constant 0 : i32
    return %arg0, %c0_i32, %c0_i32_0 : i32, i32, i32
  }
  func.func @transform_1(%arg0: i32) -> (i32, i32) {
    %c0_i32 = arith.constant 0 : i32
    %c0_i32_0 = arith.constant 0 : i32
    %c0_i32_1 = arith.constant 0 : i32
    return %c0_i32, %c0_i32_0 : i32, i32
  }
  func.func @transform_2(%arg0: i32) -> (i32, i32) {
    %c0_i32 = arith.constant 0 : i32
    %c0_i32_0 = arith.constant 0 : i32
    %c0_i32_1 = arith.constant 0 : i32
    return %c0_i32, %c0_i32_0 : i32, i32
  }
  func.func @transform_3(%arg0: i32) -> (i32, i32) {
    %c0_i32 = arith.constant 0 : i32
    %c0_i32_0 = arith.constant 0 : i32
    %c0_i32_1 = arith.constant 0 : i32
    return %c0_i32, %c0_i32_0 : i32, i32
  }
  func.func @transform_4(%arg0: i32) -> (i32, i32) {
    %c0_i32 = arith.constant 0 : i32
    %c0_i32_0 = arith.constant 0 : i32
    %c0_i32_1 = arith.constant 0 : i32
    return %c0_i32, %c0_i32_0 : i32, i32
  }
  func.func @transform_5(%arg0: i32) -> (i32, i32) {
    %c0_i32 = arith.constant 0 : i32
    %c0_i32_0 = arith.constant 0 : i32
    %c0_i32_1 = arith.constant 0 : i32
    return %c0_i32, %c0_i32_0 : i32, i32
  }
  func.func @transform_6(%arg0: i32) -> (i32, i32, i32) {
    %c0_i32 = arith.constant 0 : i32
    %c0_i32_0 = arith.constant 0 : i32
    %c0_i32_1 = arith.constant 0 : i32
    return %arg0, %c0_i32, %c0_i32_0 : i32, i32, i32
  }
}

</mosaic_0001>

<llo_original>
// kernel: gla_forward.1
$region0: #{gla_forward.1}
  #allocation0 [shape = 'u32[]', space=smem, size = 0x4, offset = 0x4, fixed_abs, tag = 'smem constant byte address 0x4 - core index']
  #allocation1 [shape = 'u32[144,128]{1,0:T(1,128)}', space=vmem, size = 0x12000, scoped, tag = 'internal scratch']
  %s0 = inlined_call_operand.vmem [shape: f32[2,8,64], index: 0, kind: input, shape index: {}]
  %s1 = inlined_call_operand.vmem [shape: f32[64,208], index: 1, kind: input, shape index: {}]
  %s2 = inlined_call_operand.vmem [shape: f32[16,32], index: 2, kind: input, shape index: {}]
  %s3 = inlined_call_operand.vmem [shape: f32[1,32], index: 3, kind: input, shape index: {}]
  %s4 = inlined_call_operand.vmem [shape: f32[1,32], index: 4, kind: input, shape index: {}]
  %s5 = inlined_call_operand.vmem [shape: f32[64,64], index: 5, kind: input, shape index: {}]
  %s6 = inlined_call_operand.hbm [shape: f32[2,8,64], index: 6, kind: output, shape index: {}]
  %s7 = sld [smem:[#allocation0]]
  $region57: #{gla_forward.1} parent=0
    _
  %s9 = ssub.s32 1, %s7
  %s10 = scalar_select 0, %s9, %s7
  $region1: #{gla_forward.1} parent=0
    #allocation2 [shape = 'u8[8192]{0}', space=vmem, size = 0x2000, scoped, tag = 'output window, operand 0']
    #allocation3 [shape = 's32[2]{0}', space=sflag, size = 0x8, scoped, tag = 'scoped memory for gla_forward.1']
    %11 = vsyncpa [#allocation3], 0
    %s12 = scalar_lea.sflag [#allocation3], 1
    %13 = vsyncpa %s12, 0
    loop: start=0, step=1, limit=4
    $region2: #{gla_forward.1} parent=1 // loop_pre_header
      _
    $region3: #{gla_forward.1} parent=1 // loop_header
      %s15 = sphi 0, %s19
      %p16 = scmp.ge.s32.totalorder %s15, 4
      %s25 = sphi 0, %s27
      %s28 = sphi 0, %s25
      %s29 = sphi 0, %s28
      %s45 = sphi 0, %s29
      %s49 = sphi 0, %s49
      %s51 = sphi 0, %s49
      %s52 = sphi 0, %s51
      %s66 = sphi 0, %s52
      %s70 = sphi 0, %s70
      %s72 = sphi 0, %s70
      %s73 = sphi 0, %s72
      %s87 = sphi 0, %s73
      %s91 = sphi 0, %s91
      %s93 = sphi 0, %s91
      %s94 = sphi 0, %s93
      %s108 = sphi 0, %s94
      %s112 = sphi 0, %s112
      %s114 = sphi 0, %s112
      %s115 = sphi 0, %s114
      %s129 = sphi 0, %s115
      %s133 = sphi 0, %s133
      %s135 = sphi 0, %s133
      %s136 = sphi 0, %s135
      %s150 = sphi 0, %s136
      %s156 = sphi 0, %s158
      %s159 = sphi 0, %s156
      %s160 = sphi 0, %s159
      %s176 = sphi 0, %s160
    $region4: #{gla_forward.1} parent=1 // loop_header_branch
      %18 = sbr.rel (%p16) target = $region8
    $region5: #{gla_forward.1} parent=1 // loop_body
      %s20 = ssub.s32 %s15, 1
      %s21 = ssub.s32 %s15, 2
      %s22 = sadd.s32 %s15, 1
      %s23 = ssub.s32 %s15, %s22
      %p24 = scmp.eq.s32.totalorder %s23, 0
      %s26 = sadd.s32 %s25, 1
      %s27 = scalar_select %p24, %s25, %s26
      %p30 = pneg %p24
      %p31 = scmp.eq.s32.totalorder %s15, 1
      %p32 = por %p30, %p31
      %p33 = scmp.ne.s32.totalorder %s25, %s28
      %p34 = scmp.eq.s32.totalorder %s15, 0
      %p35 = por %p33, %p34
      %p36 = scmp.ne.s32.totalorder %s25, %s28
      %p37 = scmp.eq.s32.totalorder %s20, 1
      %p38 = por %p36, %p37
      %p39 = scmp.ne.s32.totalorder %s28, %s29
      %p40 = scmp.eq.s32.totalorder %s20, 0
      %p41 = por %p39, %p40
      %p42 = scmp.ne.s32.totalorder %s28, %s29
      %p43 = scmp.eq.s32.totalorder %s21, 1
      %p44 = por %p42, %p43
      %p46 = scmp.ne.s32.totalorder %s29, %s45
      %p47 = scmp.eq.s32.totalorder %s21, 0
      %p48 = por %p46, %p47
      %s50 = sadd.s32 %s49, 1
      %p53 = scmp.eq.s32.totalorder %s15, 1
      %p54 = scmp.ne.s32.totalorder %s49, %s51
      %p55 = scmp.eq.s32.totalorder %s15, 0
      %p56 = por %p54, %p55
      %p57 = scmp.ne.s32.totalorder %s49, %s51
      %p58 = scmp.eq.s32.totalorder %s20, 1
      %p59 = por %p57, %p58
      %p60 = scmp.ne.s32.totalorder %s51, %s52
      %p61 = scmp.eq.s32.totalorder %s20, 0
      %p62 = por %p60, %p61
      %p63 = scmp.ne.s32.totalorder %s51, %s52
      %p64 = scmp.eq.s32.totalorder %s21, 1
      %p65 = por %p63, %p64
      %p67 = scmp.ne.s32.totalorder %s52, %s66
      %p68 = scmp.eq.s32.totalorder %s21, 0
      %p69 = por %p67, %p68
      %s71 = sadd.s32 %s70, 1
      %p74 = scmp.eq.s32.totalorder %s15, 1
      %p75 = scmp.ne.s32.totalorder %s70, %s72
      %p76 = scmp.eq.s32.totalorder %s15, 0
      %p77 = por %p75, %p76
      %p78 = scmp.ne.s32.totalorder %s70, %s72
      %p79 = scmp.eq.s32.totalorder %s20, 1
      %p80 = por %p78, %p79
      %p81 = scmp.ne.s32.totalorder %s72, %s73
      %p82 = scmp.eq.s32.totalorder %s20, 0
      %p83 = por %p81, %p82
      %p84 = scmp.ne.s32.totalorder %s72, %s73
      %p85 = scmp.eq.s32.totalorder %s21, 1
      %p86 = por %p84, %p85
      %p88 = scmp.ne.s32.totalorder %s73, %s87
      %p89 = scmp.eq.s32.totalorder %s21, 0
      %p90 = por %p88, %p89
      %s92 = sadd.s32 %s91, 1
      %p95 = scmp.eq.s32.totalorder %s15, 1
      %p96 = scmp.ne.s32.totalorder %s91, %s93
      %p97 = scmp.eq.s32.totalorder %s15, 0
      %p98 = por %p96, %p97
      %p99 = scmp.ne.s32.totalorder %s91, %s93
      %p100 = scmp.eq.s32.totalorder %s20, 1
      %p101 = por %p99, %p100
      %p102 = scmp.ne.s32.totalorder %s93, %s94
      %p103 = scmp.eq.s32.totalorder %s20, 0
      %p104 = por %p102, %p103
      %p105 = scmp.ne.s32.totalorder %s93, %s94
      %p106 = scmp.eq.s32.totalorder %s21, 1
      %p107 = por %p105, %p106
      %p109 = scmp.ne.s32.totalorder %s94, %s108
      %p110 = scmp.eq.s32.totalorder %s21, 0
      %p111 = por %p109, %p110
      %s113 = sadd.s32 %s112, 1
      %p116 = scmp.eq.s32.totalorder %s15, 1
      %p117 = scmp.ne.s32.totalorder %s112, %s114
      %p118 = scmp.eq.s32.totalorder %s15, 0
      %p119 = por %p117, %p118
      %p120 = scmp.ne.s32.totalorder %s112, %s114
      %p121 = scmp.eq.s32.totalorder %s20, 1
      %p122 = por %p120, %p121
      %p123 = scmp.ne.s32.totalorder %s114, %s115
      %p124 = scmp.eq.s32.totalorder %s20, 0
      %p125 = por %p123, %p124
      %p126 = scmp.ne.s32.totalorder %s114, %s115
      %p127 = scmp.eq.s32.totalorder %s21, 1
      %p128 = por %p126, %p127
      %p130 = scmp.ne.s32.totalorder %s115, %s129
      %p131 = scmp.eq.s32.totalorder %s21, 0
      %p132 = por %p130, %p131
      %s134 = sadd.s32 %s133, 1
      %p137 = scmp.eq.s32.totalorder %s15, 1
      %p138 = scmp.ne.s32.totalorder %s133, %s135
      %p139 = scmp.eq.s32.totalorder %s15, 0
      %p140 = por %p138, %p139
      %p141 = scmp.ne.s32.totalorder %s133, %s135
      %p142 = scmp.eq.s32.totalorder %s20, 1
      %p143 = por %p141, %p142
      %p144 = scmp.ne.s32.totalorder %s135, %s136
      %p145 = scmp.eq.s32.totalorder %s20, 0
      %p146 = por %p144, %p145
      %p147 = scmp.ne.s32.totalorder %s135, %s136
      %p148 = scmp.eq.s32.totalorder %s21, 1
      %p149 = por %p147, %p148
      %p151 = scmp.ne.s32.totalorder %s136, %s150
      %p152 = scmp.eq.s32.totalorder %s21, 0
      %p153 = por %p151, %p152
      %s154 = ssub.s32 %s15, %s22
      %p155 = scmp.eq.s32.totalorder %s154, 0
      %s157 = sadd.s32 %s156, 1
      %s158 = scalar_select %p155, %s156, %s157
      %p161 = pneg %p155
      %p162 = scmp.eq.s32.totalorder %s15, 1
      %p163 = por %p161, %p162
      %p164 = scmp.ne.s32.totalorder %s156, %s159
      %p165 = scmp.eq.s32.totalorder %s15, 0
      %p166 = por %p164, %p165
      %p167 = scmp.ne.s32.totalorder %s156, %s159
      %p168 = scmp.eq.s32.totalorder %s20, 1
      %p169 = por %p167, %p168
      %p170 = scmp.ne.s32.totalorder %s159, %s160
      %p171 = scmp.eq.s32.totalorder %s20, 0
      %p172 = por %p170, %p171
      %p173 = scmp.ne.s32.totalorder %s159, %s160
      %p174 = scmp.eq.s32.totalorder %s21, 1
      %p175 = por %p173, %p174
      %p177 = scmp.ne.s32.totalorder %s160, %s176
      %p178 = scmp.eq.s32.totalorder %s21, 0
      %p179 = por %p177, %p178
      %p180 = scmp.le.s32.totalorder 1, %s15
      %p181 = scmp.lt.s32.totalorder %s15, 3
      %p182 = pnand %p180, %p181
      %p183 = pneg %p182
      // Predicated region
      $region9: #{gla_forward.1} parent=5 // pred_check
        _
      $region10: #{gla_forward.1} parent=5 // pred_check_branch
        %185 = sbr.rel (%p182) target = $region12
      $region11: #{gla_forward.1} parent=5 // pred_region
        %s186 = ssub.s32 %s15, 1
        // Predicated region
        $region13: #{gla_forward.1} parent=11 // pred_check
          %p187 = pneg %p62
        $region14: #{gla_forward.1} parent=11 // pred_check_branch
          %189 = sbr.rel (%p187) target = $region16
        $region15: #{gla_forward.1} parent=11 // pred_region
          _
        $region16: #{gla_forward.1} parent=11 // pred_fallthru
          _
        // Predicated region
        $region17: #{gla_forward.1} parent=11 // pred_check
          %p190 = pneg %p83
        $region18: #{gla_forward.1} parent=11 // pred_check_branch
          %192 = sbr.rel (%p190) target = $region20
        $region19: #{gla_forward.1} parent=11 // pred_region
          _
        $region20: #{gla_forward.1} parent=11 // pred_fallthru
          _
        // Predicated region
        $region21: #{gla_forward.1} parent=11 // pred_check
          %p193 = pneg %p104
        $region22: #{gla_forward.1} parent=11 // pred_check_branch
          %195 = sbr.rel (%p193) target = $region24
        $region23: #{gla_forward.1} parent=11 // pred_region
          _
        $region24: #{gla_forward.1} parent=11 // pred_fallthru
          _
        // Predicated region
        $region25: #{gla_forward.1} parent=11 // pred_check
          %p196 = pneg %p125
        $region26: #{gla_forward.1} parent=11 // pred_check_branch
          %198 = sbr.rel (%p196) target = $region28
        $region27: #{gla_forward.1} parent=11 // pred_region
          _
        $region28: #{gla_forward.1} parent=11 // pred_fallthru
          _
        // Predicated region
        $region29: #{gla_forward.1} parent=11 // pred_check
          %p199 = pneg %p146
        $region30: #{gla_forward.1} parent=11 // pred_check_branch
          %201 = sbr.rel (%p199) target = $region32
        $region31: #{gla_forward.1} parent=11 // pred_region
          _
        $region32: #{gla_forward.1} parent=11 // pred_fallthru
          _
      $region12: #{gla_forward.1} parent=5 // pred_fallthru
        _
      %p202 = scmp.lt.s32.totalorder %s15, 2
      // Predicated region
      $region33: #{gla_forward.1} parent=5 // pred_check
        %p203 = pneg %p202
      $region34: #{gla_forward.1} parent=5 // pred_check_branch
        %205 = sbr.rel (%p203) target = $region36
      $region35: #{gla_forward.1} parent=5 // pred_region
        // Predicated region
        $region37: #{gla_forward.1} parent=35 // pred_check
          %p206 = pneg %p35
        $region38: #{gla_forward.1} parent=35 // pred_check_branch
          %208 = sbr.rel (%p206) target = $region40
        $region39: #{gla_forward.1} parent=35 // pred_region
          %p209 = scmp.lt.s32.totalorder %s15, 1
          %s210 = scalar_select %p209, %s15, 1
          %s211 = smul.addr %s210, 8
          %s212 = scalar_lea.vmem %s0, %s211
        $region40: #{gla_forward.1} parent=35 // pred_fallthru
          _
      $region36: #{gla_forward.1} parent=5 // pred_fallthru
        _
      %p213 = scmp.le.s32.totalorder 1, %s15
      %p214 = scmp.lt.s32.totalorder %s15, 3
      %p215 = pnand %p213, %p214
      %p216 = pneg %p215
      // Predicated region
      $region41: #{gla_forward.1} parent=5 // pred_check
        _
      $region42: #{gla_forward.1} parent=5 // pred_check_branch
        %218 = sbr.rel (%p215) target = $region44
      $region43: #{gla_forward.1} parent=5 // pred_region
        %s219 = ssub.s32 %s15, 1
        %p220 = scmp.lt.s32.totalorder %s20, 1
        %s221 = scalar_select %p220, %s20, 1
        %s222 = smul.addr %s221, 8
        %s223 = scalar_lea.vmem %s0, %s222
        %p224 = pneg %p41
        %p225 = pneg %p38
        %p226 = pneg %p62
        %p227 = pneg %p59
        %p228 = pneg %p83
        %p229 = pneg %p80
        %p230 = pneg %p104
        %p231 = pneg %p101
        %p232 = pneg %p125
        %p233 = pneg %p122
        %p234 = pneg %p146
        %p235 = pneg %p143
        %p236 = pneg %p172
        %p237 = pneg %p169
        %s238 = sand.u32 %s159, 1
        %s239 = scalar_lea.sflag [#allocation3], %s238
        %s240 = sand.u32 %s159, 1
        %s241 = smul.addr %s240, 8
        %s242 = scalar_lea.vmem [#allocation2], %s241
        %p243 = scmp.lt.s32.totalorder %s20, 1
        %s244 = scalar_select %p243, %s20, 1
        %s245 = smul.addr %s244, 8
        %s246 = scalar_lea.vmem %s0, %s245
        %v247 = vld [vmem:[%s246] sm:$0xff]
        %v248 = vld [vmem:[%s1] sm:$0xff]
        %v249 = vld [vmem:[%s1 + $0x8] sm:$0xff]
        %v250 = vld [vmem:[%s1 + $0x10] sm:$0xff]
        %v251 = vld [vmem:[%s1 + $0x18] sm:$0xff]
        %v252 = vld [vmem:[%s1 + $0x20] sm:$0xff]
        %v253 = vld [vmem:[%s1 + $0x28] sm:$0xff]
        %v254 = vld [vmem:[%s1 + $0x30] sm:$0xff]
        %v255 = vld [vmem:[%s1 + $0x38] sm:$0xff]
        %v256 = vld [vmem:[%s1 + $0x40] sm:$0xff]
        %v257 = vld [vmem:[%s1 + $0x48] sm:$0xff]
        %v258 = vld [vmem:[%s1 + $0x50] sm:$0xff]
        %v259 = vld [vmem:[%s1 + $0x58] sm:$0xff]
        %v260 = vld [vmem:[%s1 + $0x60] sm:$0xff]
        %v261 = vld [vmem:[%s1 + $0x68] sm:$0xff]
        %v262 = vld [vmem:[%s1 + $0x70] sm:$0xff]
        %v263 = vld [vmem:[%s1 + $0x78] sm:$0xff]
        %vm264 = vcmask 523264
        %v266 = vsel %vm264, %v247, 0
        %268 = vmatprep.subr.mxu0 %v249
        %269 = vmatpush1.msra.mxu0 %v248
        %270 = vmatprep.subr.mxu0 %v251
        %271 = vmatpush1.msra.mxu0 %v250
        %272 = vmatprep.subr.mxu0 %v253
        %273 = vmatpush1.msra.mxu0 %v252
        %274 = vmatprep.subr.mxu0 %v255
        %275 = vmatpush1.msra.mxu0 %v254
        %276 = vmatprep.subr.mxu0 %v257
        %277 = vmatpush1.msra.mxu0 %v256
        %278 = vmatprep.subr.mxu0 %v259
        %279 = vmatpush1.msra.mxu0 %v258
        %280 = vmatprep.subr.mxu0 %v261
        %281 = vmatpush1.msra.mxu0 %v260
        %282 = vmatprep.subr.mxu0 %v263
        %283 = vmatpush1.msra.mxu0 %v262
        %284 = vmatprep.subr.mxu0 0.0
        %285 = vmatpush1.msra.mxu0 0.0
        %286 = vmatprep.subr.mxu0 0.0
        %287 = vmatpush1.msra.mxu0 0.0
        %288 = vmatprep.subr.mxu0 0.0
        %289 = vmatpush1.msra.mxu0 0.0
        %290 = vmatprep.subr.mxu0 0.0
        %291 = vmatpush1.msra.mxu0 0.0
        %292 = vmatprep.subr.mxu0 0.0
        %293 = vmatpush1.msra.mxu0 0.0
        %294 = vmatprep.subr.mxu0 0.0
        %295 = vmatpush1.msra.mxu0 0.0
        %296 = vmatprep.subr.mxu0 0.0
        %297 = vmatpush1.msra.mxu0 0.0
        %298 = vmatprep.subr.mxu0 0.0
        %299 = vmatpush1.msra.mxu0 0.0
        %300 = vmatprep.subr.mxu0 0.0
        %301 = vmatpush1.msra.mxu0 0.0
        %302 = vmatprep.subr.mxu0 0.0
        %303 = vmatpush1.msra.mxu0 0.0
        %304 = vmatprep.subr.mxu0 0.0
        %305 = vmatpush1.msra.mxu0 0.0
        %306 = vmatprep.subr.mxu0 0.0
        %307 = vmatpush1.msra.mxu0 0.0
        %308 = vmatprep.subr.mxu0 0.0
        %309 = vmatpush1.msra.mxu0 0.0
        %310 = vmatprep.subr.mxu0 0.0
        %311 = vmatpush1.msra.mxu0 0.0
        %312 = vmatprep.subr.mxu0 0.0
        %313 = vmatpush1.msra.mxu0 0.0
        %314 = vmatprep.subr.mxu0 0.0
        %315 = vmatpush1.msra.mxu0 0.0
        %316 = vmatprep.subr.mxu0 0.0
        %317 = vmatpush1.msra.mxu0 0.0
        %318 = vmatprep.subr.mxu0 0.0
        %319 = vmatpush1.msra.mxu0 0.0
        %320 = vmatprep.subr.mxu0 0.0
        %321 = vmatpush1.msra.mxu0 0.0
        %322 = vmatprep.subr.mxu0 0.0
        %323 = vmatpush1.msra.mxu0 0.0
        %324 = vmatprep.subr.mxu0 0.0
        %325 = vmatpush1.msra.mxu0 0.0
        %326 = vmatprep.subr.mxu0 0.0
        %327 = vmatpush1.msra.mxu0 0.0
        %328 = vmatprep.subr.mxu0 0.0
        %329 = vmatpush1.msra.mxu0 0.0
        %330 = vmatprep.subr.mxu0 0.0
        %331 = vmatpush1.msra.mxu0 0.0
        %332 = vmatprep.mubr.f32.mxu0 0.0
        %333 = vmatmul.mubr.f32.gmra.mrb[0].mxu0 %v266
        %v334 = vpop.f32.mrb[0].mxu0
        %v335 = vadd.f32 0.0, %v334
        %v336 = vpop.f32.mrb[0].mxu0
        %v337 = vadd.f32 0.0, %v336
        %338 = vdwg.mxu0
        %v339 = vmul.f32 %v335, 0.25
        %v340 = vld [vmem:[%s2] sm:$0xff]
        %v341 = vld [vmem:[%s2 + $0x8] sm:$0xff]
        %v342 = vld [vmem:[%s3] sm:$0x1]
        %v344 = vlaneseq
        %v345 = vshrl.u32 %v344, 7
        %v346 = vsub.s32 0, %v345
        %v347 = vrot.slane %v342, %v346
        %350 = vrot.lane.b32.xlu0 %v337, 64
        %v351 = vpop.permute.xlu0 %350
        %vm352 = vcmask 130048
        %v353 = vsel %vm352, %v351, 0
        %355 = vmatprep.subr.mxu0 0.0
        %356 = vmatpush1.msra.mxu0 %v340
        %357 = vmatprep.subr.mxu0 0.0
        %358 = vmatpush1.msra.mxu0 %v341
        %359 = vmatprep.subr.mxu0 0.0
        %360 = vmatpush1.msra.mxu0 0.0
        %361 = vmatprep.subr.mxu0 0.0
        %362 = vmatpush1.msra.mxu0 0.0
        %363 = vmatprep.subr.mxu0 0.0
        %364 = vmatpush1.msra.mxu0 0.0
        %365 = vmatprep.subr.mxu0 0.0
        %366 = vmatpush1.msra.mxu0 0.0
        %367 = vmatprep.subr.mxu0 0.0
        %368 = vmatpush1.msra.mxu0 0.0
        %369 = vmatprep.subr.mxu0 0.0
        %370 = vmatpush1.msra.mxu0 0.0
        %371 = vmatprep.subr.mxu0 0.0
        %372 = vmatpush1.msra.mxu0 0.0
        %373 = vmatprep.subr.mxu0 0.0
        %374 = vmatpush1.msra.mxu0 0.0
        %375 = vmatprep.subr.mxu0 0.0
        %376 = vmatpush1.msra.mxu0 0.0
        %377 = vmatprep.subr.mxu0 0.0
        %378 = vmatpush1.msra.mxu0 0.0
        %379 = vmatprep.subr.mxu0 0.0
        %380 = vmatpush1.msra.mxu0 0.0
        %381 = vmatprep.subr.mxu0 0.0
        %382 = vmatpush1.msra.mxu0 0.0
        %383 = vmatprep.subr.mxu0 0.0
        %384 = vmatpush1.msra.mxu0 0.0
        %385 = vmatprep.subr.mxu0 0.0
        %386 = vmatpush1.msra.mxu0 0.0
        %387 = vmatprep.subr.mxu0 0.0
        %388 = vmatpush1.msra.mxu0 0.0
        %389 = vmatprep.subr.mxu0 0.0
        %390 = vmatpush1.msra.mxu0 0.0
        %391 = vmatprep.subr.mxu0 0.0
        %392 = vmatpush1.msra.mxu0 0.0
        %393 = vmatprep.subr.mxu0 0.0
        %394 = vmatpush1.msra.mxu0 0.0
        %395 = vmatprep.subr.mxu0 0.0
        %396 = vmatpush1.msra.mxu0 0.0
        %397 = vmatprep.subr.mxu0 0.0
        %398 = vmatpush1.msra.mxu0 0.0
        %399 = vmatprep.subr.mxu0 0.0
        %400 = vmatpush1.msra.mxu0 0.0
        %401 = vmatprep.subr.mxu0 0.0
        %402 = vmatpush1.msra.mxu0 0.0
        %403 = vmatprep.subr.mxu0 0.0
        %404 = vmatpush1.msra.mxu0 0.0
        %405 = vmatprep.subr.mxu0 0.0
        %406 = vmatpush1.msra.mxu0 0.0
        %407 = vmatprep.subr.mxu0 0.0
        %408 = vmatpush1.msra.mxu0 0.0
        %409 = vmatprep.subr.mxu0 0.0
        %410 = vmatpush1.msra.mxu0 0.0
        %411 = vmatprep.subr.mxu0 0.0
        %412 = vmatpush1.msra.mxu0 0.0
        %413 = vmatprep.subr.mxu0 0.0
        %414 = vmatpush1.msra.mxu0 0.0
        %415 = vmatprep.subr.mxu0 0.0
        %416 = vmatpush1.msra.mxu0 0.0
        %417 = vmatprep.subr.mxu0 0.0
        %418 = vmatpush1.msra.mxu0 0.0
        %419 = vmatprep.mubr.f32.mxu0 0.0
        %420 = vmatmul.mubr.f32.gmra.mrb[0].mxu0 %v353
        %v421 = vpop.f32.mrb[0].mxu0
        %v422 = vadd.f32 %v347, %v421
        %v423 = vpop.f32.mrb[0].mxu0
        %424 = vdwg.mxu0
        %v425 = vmin.f32 %v422, 0.0
        %v426 = vand.u32 2147483647, %v422
        %v427 = vsub.f32 0.0, %v426
        %v428 = vmul.f32 %v427, 1.442695
        %v429 = vpow.pop %v428
        %v430 = vadd.f32 %v429, 1.0
        %v431 = vlog2.pop %v430
        %v432 = vmul.f32 %v431, 0.6931472
        %v433 = vmul.f32 -0.5, %v429
        %v434 = vadd.f32 %v433, 1.0
        %v435 = vmul.f32 %v434, %v429
        %v436 = vand.u32 2147483647, %v429
        %vm437 = vcmp.lt.f32.partialorder %v436, 0.0004427343
        %v438 = vsel %vm437, %v435, %v432
        %v439 = vsub.f32 %v425, %v438
        %v440 = vrcp.pop 16.0
        %v441 = vmul.f32 %v439, %v440
        %v442 = vlaneseq
        %v443 = vshrl.u32 %v442, 7
        %v444 = vlaneseq
        %v445 = vand.u32 %v444, 127
        %vm446 = vcmp.ge.s32.totalorder %v443, %v445
        %v447 = vsel %vm446, 1, 0
        %v448 = vcvt.s32.f32 %v447
        %v449 = vld [vmem:[%s4] sm:$0x1]
        %vm450 = vcmask 64512
        %v452 = vsel %vm450, %v448, 0
        %454 = vmatprep.subr.mxu0 0.0
        %455 = vmatpush1.msra.mxu0 %v441
        %456 = vmatprep.subr.mxu0 0.0
        %457 = vmatpush1.msra.mxu0 0.0
        %458 = vmatprep.subr.mxu0 0.0
        %459 = vmatpush1.msra.mxu0 0.0
        %460 = vmatprep.subr.mxu0 0.0
        %461 = vmatpush1.msra.mxu0 0.0
        %462 = vmatprep.subr.mxu0 0.0
        %463 = vmatpush1.msra.mxu0 0.0
        %464 = vmatprep.subr.mxu0 0.0
        %465 = vmatpush1.msra.mxu0 0.0
        %466 = vmatprep.subr.mxu0 0.0
        %467 = vmatpush1.msra.mxu0 0.0
        %468 = vmatprep.subr.mxu0 0.0
        %469 = vmatpush1.msra.mxu0 0.0
        %470 = vmatprep.subr.mxu0 0.0
        %471 = vmatpush1.msra.mxu0 0.0
        %472 = vmatprep.subr.mxu0 0.0
        %473 = vmatpush1.msra.mxu0 0.0
        %474 = vmatprep.subr.mxu0 0.0
        %475 = vmatpush1.msra.mxu0 0.0
        %476 = vmatprep.subr.mxu0 0.0
        %477 = vmatpush1.msra.mxu0 0.0
        %478 = vmatprep.subr.mxu0 0.0
        %479 = vmatpush1.msra.mxu0 0.0
        %480 = vmatprep.subr.mxu0 0.0
        %481 = vmatpush1.msra.mxu0 0.0
        %482 = vmatprep.subr.mxu0 0.0
        %483 = vmatpush1.msra.mxu0 0.0
        %484 = vmatprep.subr.mxu0 0.0
        %485 = vmatpush1.msra.mxu0 0.0
        %486 = vmatprep.subr.mxu0 0.0
        %487 = vmatpush1.msra.mxu0 0.0
        %488 = vmatprep.subr.mxu0 0.0
        %489 = vmatpush1.msra.mxu0 0.0
        %490 = vmatprep.subr.mxu0 0.0
        %491 = vmatpush1.msra.mxu0 0.0
        %492 = vmatprep.subr.mxu0 0.0
        %493 = vmatpush1.msra.mxu0 0.0
        %494 = vmatprep.subr.mxu0 0.0
        %495 = vmatpush1.msra.mxu0 0.0
        %496 = vmatprep.subr.mxu0 0.0
        %497 = vmatpush1.msra.mxu0 0.0
        %498 = vmatprep.subr.mxu0 0.0
        %499 = vmatpush1.msra.mxu0 0.0
        %500 = vmatprep.subr.mxu0 0.0
        %501 = vmatpush1.msra.mxu0 0.0
        %502 = vmatprep.subr.mxu0 0.0
        %503 = vmatpush1.msra.mxu0 0.0
        %504 = vmatprep.subr.mxu0 0.0
        %505 = vmatpush1.msra.mxu0 0.0
        %506 = vmatprep.subr.mxu0 0.0
        %507 = vmatpush1.msra.mxu0 0.0
        %508 = vmatprep.subr.mxu0 0.0
        %509 = vmatpush1.msra.mxu0 0.0
        %510 = vmatprep.subr.mxu0 0.0
        %511 = vmatpush1.msra.mxu0 0.0
        %512 = vmatprep.subr.mxu0 0.0
        %513 = vmatpush1.msra.mxu0 0.0
        %514 = vmatprep.subr.mxu0 0.0
        %515 = vmatpush1.msra.mxu0 0.0
        %516 = vmatprep.subr.mxu0 0.0
        %517 = vmatpush1.msra.mxu0 0.0
        %518 = vmatprep.mubr.f32.mxu0 0.0
        %519 = vmatmul.mubr.f32.gmra.mrb[0].mxu0 %v452
        %v520 = vpop.f32.mrb[0].mxu0
        %v521 = vadd.f32 0.0, %v520
        %v522 = vpop.f32.mrb[0].mxu0
        %523 = vdwg.mxu0
        %v524 = vmul.f32 %v521, 1.442695
        %v525 = vpow.pop %v524
        %v526 = vmul.f32 %v339, %v525
        %v527 = vsub.f32 0.0, %v521
        %v528 = vmul.f32 %v527, 1.442695
        %v529 = vpow.pop %v528
        %531 = vrot.lane.b32.xlu0 %v529, 32
        %v532 = vpop.permute.xlu0 %531
        %v534 = vmul.f32 %v335, %v532
        %536 = vrot.lane.b32.xlu0 %v534, 96
        %v537 = vpop.permute.xlu0 %536
        %v539 = vsel %vm352, %v526, 0
        %v541 = vsel %vm352, %v537, 0
        %543 = vmatprep.subr.mxu0 0.0
        %544 = vmatpush1.xpose.msra.mxu0 %v541
        %545 = vmatprep.subr.mxu0 0.0
        %546 = vmatpush1.xpose.msra.mxu0 0.0
        %547 = vmatprep.subr.mxu0 0.0
        %548 = vmatpush1.xpose.msra.mxu0 0.0
        %549 = vmatprep.subr.mxu0 0.0
        %550 = vmatpush1.xpose.msra.mxu0 0.0
        %551 = vmatprep.subr.mxu0 0.0
        %552 = vmatpush1.xpose.msra.mxu0 0.0
        %553 = vmatprep.subr.mxu0 0.0
        %554 = vmatpush1.xpose.msra.mxu0 0.0
        %555 = vmatprep.subr.mxu0 0.0
        %556 = vmatpush1.xpose.msra.mxu0 0.0
        %557 = vmatprep.subr.mxu0 0.0
        %558 = vmatpush1.xpose.msra.mxu0 0.0
        %559 = vmatprep.subr.mxu0 0.0
        %560 = vmatpush1.xpose.msra.mxu0 0.0
        %561 = vmatprep.subr.mxu0 0.0
        %562 = vmatpush1.xpose.msra.mxu0 0.0
        %563 = vmatprep.subr.mxu0 0.0
        %564 = vmatpush1.xpose.msra.mxu0 0.0
        %565 = vmatprep.subr.mxu0 0.0
        %566 = vmatpush1.xpose.msra.mxu0 0.0
        %567 = vmatprep.subr.mxu0 0.0
        %568 = vmatpush1.xpose.msra.mxu0 0.0
        %569 = vmatprep.subr.mxu0 0.0
        %570 = vmatpush1.xpose.msra.mxu0 0.0
        %571 = vmatprep.subr.mxu0 0.0
        %572 = vmatpush1.xpose.msra.mxu0 0.0
        %573 = vmatprep.subr.mxu0 0.0
        %574 = vmatpush1.xpose.msra.mxu0 0.0
        %575 = vmatprep.subr.mxu0 0.0
        %576 = vmatpush1.xpose.msra.mxu0 0.0
        %577 = vmatprep.subr.mxu0 0.0
        %578 = vmatpush1.xpose.msra.mxu0 0.0
        %579 = vmatprep.subr.mxu0 0.0
        %580 = vmatpush1.xpose.msra.mxu0 0.0
        %581 = vmatprep.subr.mxu0 0.0
        %582 = vmatpush1.xpose.msra.mxu0 0.0
        %583 = vmatprep.subr.mxu0 0.0
        %584 = vmatpush1.xpose.msra.mxu0 0.0
        %585 = vmatprep.subr.mxu0 0.0
        %586 = vmatpush1.xpose.msra.mxu0 0.0
        %587 = vmatprep.subr.mxu0 0.0
        %588 = vmatpush1.xpose.msra.mxu0 0.0
        %589 = vmatprep.subr.mxu0 0.0
        %590 = vmatpush1.xpose.msra.mxu0 0.0
        %591 = vmatprep.subr.mxu0 0.0
        %592 = vmatpush1.xpose.msra.mxu0 0.0
        %593 = vmatprep.subr.mxu0 0.0
        %594 = vmatpush1.xpose.msra.mxu0 0.0
        %595 = vmatprep.subr.mxu0 0.0
        %596 = vmatpush1.xpose.msra.mxu0 0.0
        %597 = vmatprep.subr.mxu0 0.0
        %598 = vmatpush1.xpose.msra.mxu0 0.0
        %599 = vmatprep.subr.mxu0 0.0
        %600 = vmatpush1.xpose.msra.mxu0 0.0
        %601 = vmatprep.subr.mxu0 0.0
        %602 = vmatpush1.xpose.msra.mxu0 0.0
        %603 = vmatprep.subr.mxu0 0.0
        %604 = vmatpush1.xpose.msra.mxu0 0.0
        %605 = vmatprep.subr.mxu0 0.0
        %606 = vmatpush1.xpose.msra.mxu0 0.0
        %607 = vmatprep.mubr.f32.mxu0 0.0
        %608 = vmatmul.mubr.f32.gmra.mrb[0].mxu0 %v539
        %v609 = vpop.f32.mrb[0].mxu0
        %v610 = vadd.f32 0.0, %v609
        %v611 = vpop.f32.mrb[0].mxu0
        %612 = vdwg.mxu0
        %v613 = vsel %vm446, %v610, 0.0
        %615 = vrot.lane.b32.xlu0 %v335, 64
        %v616 = vpop.permute.xlu0 %615
        %v619 = vsel %vm450, %v613, 0
        %621 = vmatprep.subr.mxu0 0.0
        %622 = vmatpush1.msra.mxu0 %v616
        %623 = vmatprep.subr.mxu0 0.0
        %624 = vmatpush1.msra.mxu0 0.0
        %625 = vmatprep.subr.mxu0 0.0
        %626 = vmatpush1.msra.mxu0 0.0
        %627 = vmatprep.subr.mxu0 0.0
        %628 = vmatpush1.msra.mxu0 0.0
        %629 = vmatprep.subr.mxu0 0.0
        %630 = vmatpush1.msra.mxu0 0.0
        %631 = vmatprep.subr.mxu0 0.0
        %632 = vmatpush1.msra.mxu0 0.0
        %633 = vmatprep.subr.mxu0 0.0
        %634 = vmatpush1.msra.mxu0 0.0
        %635 = vmatprep.subr.mxu0 0.0
        %636 = vmatpush1.msra.mxu0 0.0
        %637 = vmatprep.subr.mxu0 0.0
        %638 = vmatpush1.msra.mxu0 0.0
        %639 = vmatprep.subr.mxu0 0.0
        %640 = vmatpush1.msra.mxu0 0.0
        %641 = vmatprep.subr.mxu0 0.0
        %642 = vmatpush1.msra.mxu0 0.0
        %643 = vmatprep.subr.mxu0 0.0
        %644 = vmatpush1.msra.mxu0 0.0
        %645 = vmatprep.subr.mxu0 0.0
        %646 = vmatpush1.msra.mxu0 0.0
        %647 = vmatprep.subr.mxu0 0.0
        %648 = vmatpush1.msra.mxu0 0.0
        %649 = vmatprep.subr.mxu0 0.0
        %650 = vmatpush1.msra.mxu0 0.0
        %651 = vmatprep.subr.mxu0 0.0
        %652 = vmatpush1.msra.mxu0 0.0
        %653 = vmatprep.subr.mxu0 0.0
        %654 = vmatpush1.msra.mxu0 0.0
        %655 = vmatprep.subr.mxu0 0.0
        %656 = vmatpush1.msra.mxu0 0.0
        %657 = vmatprep.subr.mxu0 0.0
        %658 = vmatpush1.msra.mxu0 0.0
        %659 = vmatprep.subr.mxu0 0.0
        %660 = vmatpush1.msra.mxu0 0.0
        %661 = vmatprep.subr.mxu0 0.0
        %662 = vmatpush1.msra.mxu0 0.0
        %663 = vmatprep.subr.mxu0 0.0
        %664 = vmatpush1.msra.mxu0 0.0
        %665 = vmatprep.subr.mxu0 0.0
        %666 = vmatpush1.msra.mxu0 0.0
        %667 = vmatprep.subr.mxu0 0.0
        %668 = vmatpush1.msra.mxu0 0.0
        %669 = vmatprep.subr.mxu0 0.0
        %670 = vmatpush1.msra.mxu0 0.0
        %671 = vmatprep.subr.mxu0 0.0
        %672 = vmatpush1.msra.mxu0 0.0
        %673 = vmatprep.subr.mxu0 0.0
        %674 = vmatpush1.msra.mxu0 0.0
        %675 = vmatprep.subr.mxu0 0.0
        %676 = vmatpush1.msra.mxu0 0.0
        %677 = vmatprep.subr.mxu0 0.0
        %678 = vmatpush1.msra.mxu0 0.0
        %679 = vmatprep.subr.mxu0 0.0
        %680 = vmatpush1.msra.mxu0 0.0
        %681 = vmatprep.subr.mxu0 0.0
        %682 = vmatpush1.msra.mxu0 0.0
        %683 = vmatprep.subr.mxu0 0.0
        %684 = vmatpush1.msra.mxu0 0.0
        %685 = vmatprep.mubr.f32.mxu0 0.0
        %686 = vmatmul.mubr.f32.gmra.mrb[0].mxu0 %v619
        %v687 = vpop.f32.mrb[0].mxu0
        %v688 = vadd.f32 0.0, %v687
        %v689 = vpop.f32.mrb[0].mxu0
        %690 = vdwg.mxu0
        %v691 = vmul.f32 %v688, %v688
        %vm692 = vcmask 261120
        %v693 = vsel %vm692, %v691, 0.0
        %694 = vadd.xlane.f32.xlu0 %v693
        %v695 = vpop.xlane.xlu0 %694
        %v696 = vrcp.pop 32.0
        %v697 = vmul.f32 %v695, %v696
        %v698 = vadd.f32 %v697, 1e-05
        %v699 = vrsqrt.pop %v698
        %v700 = vmul.f32 %v688, %v699
        %v702 = vlaneseq
        %v703 = vshrl.u32 %v702, 7
        %v704 = vsub.s32 0, %v703
        %v705 = vrot.slane %v449, %v704
        %v707 = vmul.f32 %v700, %v705
        %v708 = vxor.u32 %v337, 2147483648
        %v709 = vmul.f32 %v708, 1.442695
        %v710 = vpow.pop %v709
        %v711 = vadd.f32 %v710, 1.0
        %v712 = vrcp.pop %v711
        %v713 = vmul.f32 1.0, %v712
        %v714 = vmul.f32 %v337, %v713
        %v715 = vmul.f32 %v707, %v714
        %v716 = vld [vmem:[%s5] sm:$0xff]
        %v717 = vld [vmem:[%s5 + $0x8] sm:$0xff]
        %v718 = vld [vmem:[%s5 + $0x10] sm:$0xff]
        %v719 = vld [vmem:[%s5 + $0x18] sm:$0xff]
        %720 = vrot.lane.b32.xlu0 %v526, 112
        %v721 = vpop.permute.xlu0 %720
        %722 = vrot.lane.b32.xlu0 %v534, 80
        %v723 = vpop.permute.xlu0 %722
        %v724 = vsel %vm352, %v721, 0
        %v726 = vsel %vm352, %v723, 0
        %728 = vmatprep.subr.mxu0 0.0
        %729 = vmatpush1.xpose.msra.mxu0 %v726
        %730 = vmatprep.subr.mxu0 0.0
        %731 = vmatpush1.xpose.msra.mxu0 0.0
        %732 = vmatprep.subr.mxu0 0.0
        %733 = vmatpush1.xpose.msra.mxu0 0.0
        %734 = vmatprep.subr.mxu0 0.0
        %735 = vmatpush1.xpose.msra.mxu0 0.0
        %736 = vmatprep.subr.mxu0 0.0
        %737 = vmatpush1.xpose.msra.mxu0 0.0
        %738 = vmatprep.subr.mxu0 0.0
        %739 = vmatpush1.xpose.msra.mxu0 0.0
        %740 = vmatprep.subr.mxu0 0.0
        %741 = vmatpush1.xpose.msra.mxu0 0.0
        %742 = vmatprep.subr.mxu0 0.0
        %743 = vmatpush1.xpose.msra.mxu0 0.0
        %744 = vmatprep.subr.mxu0 0.0
        %745 = vmatpush1.xpose.msra.mxu0 0.0
        %746 = vmatprep.subr.mxu0 0.0
        %747 = vmatpush1.xpose.msra.mxu0 0.0
        %748 = vmatprep.subr.mxu0 0.0
        %749 = vmatpush1.xpose.msra.mxu0 0.0
        %750 = vmatprep.subr.mxu0 0.0
        %751 = vmatpush1.xpose.msra.mxu0 0.0
        %752 = vmatprep.subr.mxu0 0.0
        %753 = vmatpush1.xpose.msra.mxu0 0.0
        %754 = vmatprep.subr.mxu0 0.0
        %755 = vmatpush1.xpose.msra.mxu0 0.0
        %756 = vmatprep.subr.mxu0 0.0
        %757 = vmatpush1.xpose.msra.mxu0 0.0
        %758 = vmatprep.subr.mxu0 0.0
        %759 = vmatpush1.xpose.msra.mxu0 0.0
        %760 = vmatprep.subr.mxu0 0.0
        %761 = vmatpush1.xpose.msra.mxu0 0.0
        %762 = vmatprep.subr.mxu0 0.0
        %763 = vmatpush1.xpose.msra.mxu0 0.0
        %764 = vmatprep.subr.mxu0 0.0
        %765 = vmatpush1.xpose.msra.mxu0 0.0
        %766 = vmatprep.subr.mxu0 0.0
        %767 = vmatpush1.xpose.msra.mxu0 0.0
        %768 = vmatprep.subr.mxu0 0.0
        %769 = vmatpush1.xpose.msra.mxu0 0.0
        %770 = vmatprep.subr.mxu0 0.0
        %771 = vmatpush1.xpose.msra.mxu0 0.0
        %772 = vmatprep.subr.mxu0 0.0
        %773 = vmatpush1.xpose.msra.mxu0 0.0
        %774 = vmatprep.subr.mxu0 0.0
        %775 = vmatpush1.xpose.msra.mxu0 0.0
        %776 = vmatprep.subr.mxu0 0.0
        %777 = vmatpush1.xpose.msra.mxu0 0.0
        %778 = vmatprep.subr.mxu0 0.0
        %779 = vmatpush1.xpose.msra.mxu0 0.0
        %780 = vmatprep.subr.mxu0 0.0
        %781 = vmatpush1.xpose.msra.mxu0 0.0
        %782 = vmatprep.subr.mxu0 0.0
        %783 = vmatpush1.xpose.msra.mxu0 0.0
        %784 = vmatprep.subr.mxu0 0.0
        %785 = vmatpush1.xpose.msra.mxu0 0.0
        %786 = vmatprep.subr.mxu0 0.0
        %787 = vmatpush1.xpose.msra.mxu0 0.0
        %788 = vmatprep.subr.mxu0 0.0
        %789 = vmatpush1.xpose.msra.mxu0 0.0
        %790 = vmatprep.subr.mxu0 0.0
        %791 = vmatpush1.xpose.msra.mxu0 0.0
        %792 = vmatprep.mubr.f32.mxu0 0.0
        %793 = vmatmul.mubr.f32.gmra.mrb[0].mxu0 %v724
        %v794 = vpop.f32.mrb[0].mxu0
        %v795 = vadd.f32 0.0, %v794
        %v796 = vpop.f32.mrb[0].mxu0
        %797 = vdwg.mxu0
        %v798 = vsel %vm446, %v795, 0.0
        %799 = vrot.lane.b32.xlu0 %v335, 32
        %v800 = vpop.permute.xlu0 %799
        %v803 = vsel %vm450, %v798, 0
        %805 = vmatprep.subr.mxu0 0.0
        %806 = vmatpush1.msra.mxu0 %v800
        %807 = vmatprep.subr.mxu0 0.0
        %808 = vmatpush1.msra.mxu0 0.0
        %809 = vmatprep.subr.mxu0 0.0
        %810 = vmatpush1.msra.mxu0 0.0
        %811 = vmatprep.subr.mxu0 0.0
        %812 = vmatpush1.msra.mxu0 0.0
        %813 = vmatprep.subr.mxu0 0.0
        %814 = vmatpush1.msra.mxu0 0.0
        %815 = vmatprep.subr.mxu0 0.0
        %816 = vmatpush1.msra.mxu0 0.0
        %817 = vmatprep.subr.mxu0 0.0
        %818 = vmatpush1.msra.mxu0 0.0
        %819 = vmatprep.subr.mxu0 0.0
        %820 = vmatpush1.msra.mxu0 0.0
        %821 = vmatprep.subr.mxu0 0.0
        %822 = vmatpush1.msra.mxu0 0.0
        %823 = vmatprep.subr.mxu0 0.0
        %824 = vmatpush1.msra.mxu0 0.0
        %825 = vmatprep.subr.mxu0 0.0
        %826 = vmatpush1.msra.mxu0 0.0
        %827 = vmatprep.subr.mxu0 0.0
        %828 = vmatpush1.msra.mxu0 0.0
        %829 = vmatprep.subr.mxu0 0.0
        %830 = vmatpush1.msra.mxu0 0.0
        %831 = vmatprep.subr.mxu0 0.0
        %832 = vmatpush1.msra.mxu0 0.0
        %833 = vmatprep.subr.mxu0 0.0
        %834 = vmatpush1.msra.mxu0 0.0
        %835 = vmatprep.subr.mxu0 0.0
        %836 = vmatpush1.msra.mxu0 0.0
        %837 = vmatprep.subr.mxu0 0.0
        %838 = vmatpush1.msra.mxu0 0.0
        %839 = vmatprep.subr.mxu0 0.0
        %840 = vmatpush1.msra.mxu0 0.0
        %841 = vmatprep.subr.mxu0 0.0
        %842 = vmatpush1.msra.mxu0 0.0
        %843 = vmatprep.subr.mxu0 0.0
        %844 = vmatpush1.msra.mxu0 0.0
        %845 = vmatprep.subr.mxu0 0.0
        %846 = vmatpush1.msra.mxu0 0.0
        %847 = vmatprep.subr.mxu0 0.0
        %848 = vmatpush1.msra.mxu0 0.0
        %849 = vmatprep.subr.mxu0 0.0
        %850 = vmatpush1.msra.mxu0 0.0
        %851 = vmatprep.subr.mxu0 0.0
        %852 = vmatpush1.msra.mxu0 0.0
        %853 = vmatprep.subr.mxu0 0.0
        %854 = vmatpush1.msra.mxu0 0.0
        %855 = vmatprep.subr.mxu0 0.0
        %856 = vmatpush1.msra.mxu0 0.0
        %857 = vmatprep.subr.mxu0 0.0
        %858 = vmatpush1.msra.mxu0 0.0
        %859 = vmatprep.subr.mxu0 0.0
        %860 = vmatpush1.msra.mxu0 0.0
        %861 = vmatprep.subr.mxu0 0.0
        %862 = vmatpush1.msra.mxu0 0.0
        %863 = vmatprep.subr.mxu0 0.0
        %864 = vmatpush1.msra.mxu0 0.0
        %865 = vmatprep.subr.mxu0 0.0
        %866 = vmatpush1.msra.mxu0 0.0
        %867 = vmatprep.subr.mxu0 0.0
        %868 = vmatpush1.msra.mxu0 0.0
        %869 = vmatprep.mubr.f32.mxu0 0.0
        %870 = vmatmul.mubr.f32.gmra.mrb[0].mxu0 %v803
        %v871 = vpop.f32.mrb[0].mxu0
        %v872 = vadd.f32 0.0, %v871
        %v873 = vpop.f32.mrb[0].mxu0
        %874 = vdwg.mxu0
        %v875 = vmul.f32 %v872, %v872
        %v876 = vsel %vm692, %v875, 0.0
        %877 = vadd.xlane.f32.xlu0 %v876
        %v878 = vpop.xlane.xlu0 %877
        %v879 = vmul.f32 %v878, %v696
        %v880 = vadd.f32 %v879, 1e-05
        %v881 = vrsqrt.pop %v880
        %v882 = vmul.f32 %v872, %v881
        %v883 = vmul.f32 %v882, %v705
        %885 = vrot.lane.b32.xlu0 %v714, 96
        %v886 = vpop.permute.xlu0 %885
        %v888 = vmul.f32 %v883, %v886
        %v889 = vld [vmem:[%s5 + $0x20] sm:$0xff]
        %v890 = vld [vmem:[%s5 + $0x28] sm:$0xff]
        %v891 = vld [vmem:[%s5 + $0x30] sm:$0xff]
        %v892 = vld [vmem:[%s5 + $0x38] sm:$0xff]
        %v894 = vsel %vm692, %v888, 0
        %896 = vmatprep.subr.mxu0 0.0
        %897 = vmatpush1.msra.mxu0 %v889
        %898 = vmatprep.subr.mxu0 0.0
        %899 = vmatpush1.msra.mxu0 %v890
        %900 = vmatprep.subr.mxu0 0.0
        %901 = vmatpush1.msra.mxu0 %v891
        %902 = vmatprep.subr.mxu0 0.0
        %903 = vmatpush1.msra.mxu0 %v892
        %904 = vmatprep.subr.mxu0 0.0
        %905 = vmatpush1.msra.mxu0 0.0
        %906 = vmatprep.subr.mxu0 0.0
        %907 = vmatpush1.msra.mxu0 0.0
        %908 = vmatprep.subr.mxu0 0.0
        %909 = vmatpush1.msra.mxu0 0.0
        %910 = vmatprep.subr.mxu0 0.0
        %911 = vmatpush1.msra.mxu0 0.0
        %912 = vmatprep.subr.mxu0 0.0
        %913 = vmatpush1.msra.mxu0 0.0
        %914 = vmatprep.subr.mxu0 0.0
        %915 = vmatpush1.msra.mxu0 0.0
        %916 = vmatprep.subr.mxu0 0.0
        %917 = vmatpush1.msra.mxu0 0.0
        %918 = vmatprep.subr.mxu0 0.0
        %919 = vmatpush1.msra.mxu0 0.0
        %920 = vmatprep.subr.mxu0 0.0
        %921 = vmatpush1.msra.mxu0 0.0
        %922 = vmatprep.subr.mxu0 0.0
        %923 = vmatpush1.msra.mxu0 0.0
        %924 = vmatprep.subr.mxu0 0.0
        %925 = vmatpush1.msra.mxu0 0.0
        %926 = vmatprep.subr.mxu0 0.0
        %927 = vmatpush1.msra.mxu0 0.0
        %928 = vmatprep.subr.mxu0 0.0
        %929 = vmatpush1.msra.mxu0 0.0
        %930 = vmatprep.subr.mxu0 0.0
        %931 = vmatpush1.msra.mxu0 0.0
        %932 = vmatprep.subr.mxu0 0.0
        %933 = vmatpush1.msra.mxu0 0.0
        %934 = vmatprep.subr.mxu0 0.0
        %935 = vmatpush1.msra.mxu0 0.0
        %936 = vmatprep.subr.mxu0 0.0
        %937 = vmatpush1.msra.mxu0 0.0
        %938 = vmatprep.subr.mxu0 0.0
        %939 = vmatpush1.msra.mxu0 0.0
        %940 = vmatprep.subr.mxu0 0.0
        %941 = vmatpush1.msra.mxu0 0.0
        %942 = vmatprep.subr.mxu0 0.0
        %943 = vmatpush1.msra.mxu0 0.0
        %944 = vmatprep.subr.mxu0 0.0
        %945 = vmatpush1.msra.mxu0 0.0
        %946 = vmatprep.subr.mxu0 0.0
        %947 = vmatpush1.msra.mxu0 0.0
        %948 = vmatprep.subr.mxu0 0.0
        %949 = vmatpush1.msra.mxu0 0.0
        %950 = vmatprep.subr.mxu0 0.0
        %951 = vmatpush1.msra.mxu0 0.0
        %952 = vmatprep.subr.mxu0 0.0
        %953 = vmatpush1.msra.mxu0 0.0
        %954 = vmatprep.subr.mxu0 0.0
        %955 = vmatpush1.msra.mxu0 0.0
        %956 = vmatprep.subr.mxu0 0.0
        %957 = vmatpush1.msra.mxu0 0.0
        %958 = vmatprep.subr.mxu0 0.0
        %959 = vmatpush1.msra.mxu0 0.0
        %960 = vmatprep.mubr.f32.mxu0 0.0
        %961 = vmatmul.mubr.f32.gmra.mrb[0].mxu0 %v894
        %v962 = vpop.f32.mrb[0].mxu0
        %v963 = vadd.f32 0.0, %v962
        %v964 = vpop.f32.mrb[0].mxu0
        %965 = vdwg.mxu0
        %v967 = vsel %vm692, %v715, 0
        %969 = vmatprep.subr.mxu0 0.0
        %970 = vmatpush1.msra.mxu0 %v716
        %971 = vmatprep.subr.mxu0 0.0
        %972 = vmatpush1.msra.mxu0 %v717
        %973 = vmatprep.subr.mxu0 0.0
        %974 = vmatpush1.msra.mxu0 %v718
        %975 = vmatprep.subr.mxu0 0.0
        %976 = vmatpush1.msra.mxu0 %v719
        %977 = vmatprep.subr.mxu0 0.0
        %978 = vmatpush1.msra.mxu0 0.0
        %979 = vmatprep.subr.mxu0 0.0
        %980 = vmatpush1.msra.mxu0 0.0
        %981 = vmatprep.subr.mxu0 0.0
        %982 = vmatpush1.msra.mxu0 0.0
        %983 = vmatprep.subr.mxu0 0.0
        %984 = vmatpush1.msra.mxu0 0.0
        %985 = vmatprep.subr.mxu0 0.0
        %986 = vmatpush1.msra.mxu0 0.0
        %987 = vmatprep.subr.mxu0 0.0
        %988 = vmatpush1.msra.mxu0 0.0
        %989 = vmatprep.subr.mxu0 0.0
        %990 = vmatpush1.msra.mxu0 0.0
        %991 = vmatprep.subr.mxu0 0.0
        %992 = vmatpush1.msra.mxu0 0.0
        %993 = vmatprep.subr.mxu0 0.0
        %994 = vmatpush1.msra.mxu0 0.0
        %995 = vmatprep.subr.mxu0 0.0
        %996 = vmatpush1.msra.mxu0 0.0
        %997 = vmatprep.subr.mxu0 0.0
        %998 = vmatpush1.msra.mxu0 0.0
        %999 = vmatprep.subr.mxu0 0.0
        %1000 = vmatpush1.msra.mxu0 0.0
        %1001 = vmatprep.subr.mxu0 0.0
        %1002 = vmatpush1.msra.mxu0 0.0
        %1003 = vmatprep.subr.mxu0 0.0
        %1004 = vmatpush1.msra.mxu0 0.0
        %1005 = vmatprep.subr.mxu0 0.0
        %1006 = vmatpush1.msra.mxu0 0.0
        %1007 = vmatprep.subr.mxu0 0.0
        %1008 = vmatpush1.msra.mxu0 0.0
        %1009 = vmatprep.subr.mxu0 0.0
        %1010 = vmatpush1.msra.mxu0 0.0
        %1011 = vmatprep.subr.mxu0 0.0
        %1012 = vmatpush1.msra.mxu0 0.0
        %1013 = vmatprep.subr.mxu0 0.0
        %1014 = vmatpush1.msra.mxu0 0.0
        %1015 = vmatprep.subr.mxu0 0.0
        %1016 = vmatpush1.msra.mxu0 0.0
        %1017 = vmatprep.subr.mxu0 0.0
        %1018 = vmatpush1.msra.mxu0 0.0
        %1019 = vmatprep.subr.mxu0 0.0
        %1020 = vmatpush1.msra.mxu0 0.0
        %1021 = vmatprep.subr.mxu0 0.0
        %1022 = vmatpush1.msra.mxu0 0.0
        %1023 = vmatprep.subr.mxu0 0.0
        %1024 = vmatpush1.msra.mxu0 0.0
        %1025 = vmatprep.subr.mxu0 0.0
        %1026 = vmatpush1.msra.mxu0 0.0
        %1027 = vmatprep.subr.mxu0 0.0
        %1028 = vmatpush1.msra.mxu0 0.0
        %1029 = vmatprep.subr.mxu0 0.0
        %1030 = vmatpush1.msra.mxu0 0.0
        %1031 = vmatprep.subr.mxu0 0.0
        %1032 = vmatpush1.msra.mxu0 0.0
        %1033 = vmatprep.mubr.f32.mxu0 0.0
        %1034 = vmatmul.mubr.f32.gmra.mrb[0].mxu0 %v967
        %v1035 = vpop.f32.mrb[0].mxu0
        %v1036 = vadd.f32 %v963, %v1035
        %v1037 = vpop.f32.mrb[0].mxu0
        %1038 = vdwg.mxu0
        %1039 = vst.msk [vmem:[%s242] sm:$0xff] %vm264, %v1036
        %s1040 = sand.u32 %s159, 1
        %s1041 = scalar_lea.sflag [#allocation3], %s1040
        %s1042 = sand.u32 %s159, 1
        %s1043 = smul.addr %s1042, 8
        %s1044 = scalar_lea.vmem [#allocation2], %s1043
        // Predicated region
        $region45: #{gla_forward.1} parent=43 // pred_check
          %p1045 = pneg %p169
        $region46: #{gla_forward.1} parent=43 // pred_check_branch
          %1047 = sbr.rel (%p1045) target = $region48
        $region47: #{gla_forward.1} parent=43 // pred_region
          %s1049 = ssub.s32 128, 128
          %1050 = vsyncadd %s1041, %s1049
          %s1051 = smul.addr %s20, 128
          %s1052 = scalar_lea.hbm %s6, %s1051
          %s1054 = sshll.u32 %s1044, 4
          %s1055 = int_to_ptr.vmem [resolvable:$true] %s1054
          %1057 = dma.vmem_to_hbm [thread:$0]  %s1055, 128, %s1052, %s1041
        $region48: #{gla_forward.1} parent=43 // pred_fallthru
          _
      $region44: #{gla_forward.1} parent=5 // pred_fallthru
        _
      %p1058 = scmp.le.s32.totalorder 2, %s15
      // Predicated region
      $region49: #{gla_forward.1} parent=5 // pred_check
        %p1059 = pneg %p1058
      $region50: #{gla_forward.1} parent=5 // pred_check_branch
        %1061 = sbr.rel (%p1059) target = $region52
      $region51: #{gla_forward.1} parent=5 // pred_region
        %s1062 = ssub.s32 %s15, 2
        // Predicated region
        $region53: #{gla_forward.1} parent=51 // pred_check
          %p1063 = pneg %p175
        $region54: #{gla_forward.1} parent=51 // pred_check_branch
          %1065 = sbr.rel (%p1063) target = $region56
        $region55: #{gla_forward.1} parent=51 // pred_region
          %s1066 = sand.u32 %s160, 1
          %s1067 = scalar_lea.sflag [#allocation3], %s1066
          %s1068 = sand.u32 %s160, 1
          %s1069 = smul.addr %s1068, 8
          %s1070 = scalar_lea.vmem [#allocation2], %s1069
          %1071 = dma.done %s1067, 128
        $region56: #{gla_forward.1} parent=51 // pred_fallthru
          _
      $region52: #{gla_forward.1} parent=5 // pred_fallthru
        _
    $region6: #{gla_forward.1} parent=1 // loop_footer
      %s19 = sadd.s32 1, %s15
    $region7: #{gla_forward.1} parent=1 // loop_footer_branch
      %14 = sbr.rel target = $region3
    $region8: #{gla_forward.1} parent=1 // loop_exit
      _
    %1072 = vsyncpa [#allocation3], 1
    %s1073 = scalar_lea.sflag [#allocation3], 1
    %1074 = vsyncpa %s1073, 1

</llo_original>
